<compile_context>
chip_gen: v6e
topology: v6e:2x2x1
jax: 0.10.0
libtpu: 0.0.40
codegen_flags: <defaults>
</compile_context>

<pallas_src>
import jax
import jax.numpy as jnp
from jax.experimental import pallas as pl
from jax.experimental.pallas import tpu as pltpu


def _round_up(x, m):
    return ((x + m - 1) // m) * m


def _make_kernel(*, t_blk, b_blk, seq_length, n_sub, hoist_whh, mxu_dtype):
    """Builds the recurrence kernel with all tiling parameters baked in statically."""
    sub = b_blk // n_sub
    needs_mask = (seq_length % t_blk) != 0
    first_maybe_invalid = seq_length % t_blk  # only meaningful when needs_mask

    def kernel(x_ref, whx_ref, bh_ref, whh_ref, wph_ref, bp_ref, out_ref, h_scratch):
        t_idx = pl.program_id(1)

        @pl.when(t_idx == 0)
        def _init():                     # h_init is zeros in the PyTorch module
            h_scratch[...] = jnp.zeros_like(h_scratch)

        # ---- fused input projection for the whole time block: one wide matmul.
        d = x_ref.shape[-1]
        x2 = x_ref[...].reshape(t_blk * b_blk, d).astype(mxu_dtype)
        xw = jnp.dot(x2, whx_ref[...],
                     preferred_element_type=jnp.float32) + bh_ref[...]

        # Only hoist the recurrent weight into registers when it is small.
        whh_reg = whh_ref[...] if hoist_whh else None

        # Carry the hidden state in registers within the block, split into
        # n_sub independent sub-chains so their matmul / tanh can interleave.
        hs = [h_scratch[c * sub:(c + 1) * sub, :] for c in range(n_sub)]

        t_base = t_idx * t_blk
        for t in range(t_blk):           # static, fully unrolled
            xw_t = xw[t * b_blk:(t + 1) * b_blk]
            w = whh_reg if hoist_whh else whh_ref[...]
            new_hs = []
            for c in range(n_sub):
                pre = xw_t[c * sub:(c + 1) * sub] + jnp.dot(
                    hs[c].astype(mxu_dtype), w,
                    preferred_element_type=jnp.float32)
                h_new = jnp.tanh(pre)    # f32 elementwise (v5e-friendly)
                if needs_mask and t >= first_maybe_invalid:
                    # Padded tail steps are NOT identity steps -> keep old h.
                    h_new = jnp.where(t_base + t < seq_length, h_new, hs[c])
                new_hs.append(h_new)
            hs = new_hs

        for c in range(n_sub):
            h_scratch[c * sub:(c + 1) * sub, :] = hs[c]

        @pl.when(t_idx == pl.num_programs(1) - 1)
        def _finalize():
            # Use the register-resident h (not the scratch copy) so the
            # epilogue matmul is not serialized behind the scratch store.
            wph = wph_ref[...]
            bp = bp_ref[...]
            for c in range(n_sub):
                out_ref[c * sub:(c + 1) * sub, :] = (
                    jnp.dot(hs[c].astype(mxu_dtype), wph,
                            preferred_element_type=jnp.float32) + bp
                ).astype(out_ref.dtype)

    return kernel


def vanilla_rnn_forward(x, w_hx, w_hh, b_h, w_ph, b_p, *,
                        max_t_block=16, mxu_dtype=jnp.bfloat16):
    """x: (B, T, D) float32 (same convention as the PyTorch module). Returns (B, C)."""
    B, T, D = x.shape
    H = w_hx.shape[0]
    C = w_ph.shape[0]

    B_pad = _round_up(B, 8)              # sublane
    H_pad = _round_up(H, 128)            # lane
    C_pad = _round_up(C, 128)            # lane (unmasked vst on the output)

    # ---- batch tile: <=128 (v5e MXU natural M); >=2 batch blocks whenever
    # possible so the leading "parallel" axis spans both TCs on v7x.
    cap = 128
    if B_pad >= 16:
        cap = min(cap, B_pad // 2)
    cap = max(8, (cap // 8) * 8)
    b_blk = 8
    for cand in range(cap, 7, -8):
        if B_pad % cand == 0:
            b_blk = cand
            break
    n_sub = 2 if b_blk >= 16 else 1      # interleaved independent sub-chains

    # ---- time tile: cdiv tiling (no divisor requirement; tail masked in-kernel).
    t_blk = max(1, min(T, max_t_block))
    t_grid = pl.cdiv(T, t_blk)
    T_pad = t_grid * t_blk

    # Time-major x, zero-padded in batch and (cdiv) time.  Only x is streamed;
    # the input projection happens in-kernel (no (T,B,H) intermediate in HBM).
    x_tb = jnp.transpose(x, (1, 0, 2))
    x_tb = jnp.pad(x_tb, ((0, T_pad - T), (0, B_pad - B), (0, 0)))

    # Weights pre-transposed + zero-padded (padded hidden/class lanes stay 0).
    whx_t = jnp.pad(w_hx.T, ((0, 0), (0, H_pad - H))).astype(mxu_dtype)       # (D, H_pad)
    bh = jnp.pad(b_h.reshape(1, H), ((0, 0), (0, H_pad - H))).astype(jnp.float32)
    whh_t = jnp.pad(w_hh.T, ((0, H_pad - H), (0, H_pad - H))).astype(mxu_dtype)
    wph_t = jnp.pad(w_ph.T, ((0, H_pad - H), (0, C_pad - C))).astype(mxu_dtype)
    bp = jnp.pad(b_p.reshape(1, C), ((0, 0), (0, C_pad - C))).astype(jnp.float32)

    # ---- per-generation VMEM sizing (v7x: 64 MiB, v5e/v6e: 128 MiB).
    try:
        vmem_cap = int(getattr(pltpu.get_tpu_info(), "vmem_capacity_bytes", 64 << 20))
    except Exception:
        vmem_cap = 64 << 20
    vmem_limit = int(min(vmem_cap // 2, 96 << 20))

    kernel = _make_kernel(t_blk=t_blk, b_blk=b_blk, seq_length=T,
                          n_sub=n_sub, hoist_whh=(H_pad <= 128),
                          mxu_dtype=mxu_dtype)

    grid = (B_pad // b_blk, t_grid)

    grid_spec = pltpu.PrefetchScalarGridSpec(
        num_scalar_prefetch=0,
        grid=grid,
        in_specs=[
            pl.BlockSpec((t_blk, b_blk, D), lambda b, t: (t, b, 0)),   # x stream
            pl.BlockSpec((D, H_pad), lambda b, t: (0, 0)),             # W_hx^T
            pl.BlockSpec((1, H_pad), lambda b, t: (0, 0)),             # b_h row
            pl.BlockSpec((H_pad, H_pad), lambda b, t: (0, 0)),         # W_hh^T
            pl.BlockSpec((H_pad, C_pad), lambda b, t: (0, 0)),         # W_ph^T
            pl.BlockSpec((1, C_pad), lambda b, t: (0, 0)),             # b_p row
        ],
        out_specs=pl.BlockSpec((b_blk, C_pad), lambda b, t: (b, 0)),
        scratch_shapes=[pltpu.VMEM((b_blk, H_pad), jnp.float32)],
    )

    out_padded = pl.pallas_call(
        kernel,
        out_shape=jax.ShapeDtypeStruct((B_pad, C_pad), jnp.float32),
        grid_spec=grid_spec,
        compiler_params=pltpu.CompilerParams(
            dimension_semantics=("parallel", "arbitrary"),
            vmem_limit_bytes=vmem_limit),
    )(x_tb, whx_t, bh, whh_t, wph_t, bp)

    return out_padded[:B, :C]


def orthogonal(key, rows, cols):
    """Deterministic orthogonal init (mirrors nn.init.orthogonal_ semantics)."""
    n = max(rows, cols)
    a = jax.random.normal(key, (n, n), dtype=jnp.float32)
    q, r = jnp.linalg.qr(a)
    q = q * jnp.sign(jnp.diag(r))
    return q[:rows, :cols]


def _ref_forward(x, w_hx, w_hh, b_h, w_ph, b_p):
    """Plain-JAX reference with the exact PyTorch math (column-major hidden, f32)."""
    T = x.shape[1]
    H = w_hx.shape[0]
    h = jnp.zeros((H, 1), jnp.float32)
    for t in range(T):
        h = jnp.tanh(w_hx @ x[:, t].T + w_hh @ h + b_h)
    p = w_ph @ h + b_p
    return p.T


def _make_params(key, input_dim, num_hidden, num_classes):
    k_hx, k_hh, k_ph = jax.random.split(key, 3)
    w_hx = orthogonal(k_hx, num_hidden, input_dim)             # (H, D)
    w_hh = orthogonal(k_hh, num_hidden, num_hidden)            # (H, H)
    b_h = jnp.zeros((num_hidden, 1), jnp.float32)              # (H, 1)
    w_ph = 1e-4 * jax.random.normal(
        k_ph, (num_classes, num_hidden), dtype=jnp.float32)    # (C, H)
    b_p = jnp.zeros((num_classes, 1), jnp.float32)             # (C, 1)
    return w_hx, w_hh, b_h, w_ph, b_p


if __name__ == "__main__":
    key = jax.random.PRNGKey(0)

    # ---- check 1: small shapes consistent with the module; max_t_block=3 forces
    # cdiv time tiling with a masked tail block (T=8 -> blocks of 3,3,2).
    seq_length, input_dim, num_hidden, num_classes, batch_size = 8, 4, 32, 10, 2
    k_x, k_p, key = jax.random.split(key, 3)
    x = jax.random.normal(k_x, (batch_size, seq_length, input_dim), dtype=jnp.float32)
    w_hx, w_hh, b_h, w_ph, b_p = _make_params(k_p, input_dim, num_hidden, num_classes)

    out = vanilla_rnn_forward(x, w_hx, w_hh, b_h, w_ph, b_p, max_t_block=3)
    out = jax.block_until_ready(out)
    ref = _ref_forward(x, w_hx, w_hh, b_h, w_ph, b_p)
    assert out.shape == (batch_size, num_classes)
    assert jnp.allclose(out, ref, atol=3e-4, rtol=2e-2), \
        f"check1 max abs diff {float(jnp.max(jnp.abs(out - ref)))}"

    # ---- check 2: exercises multiple batch blocks, 2-way sub-chain interleave,
    # the non-hoisted W_hh path (H_pad=256) and an odd sequence length.
    seq_length, input_dim, num_hidden, num_classes, batch_size = 7, 4, 200, 10, 32
    k_x, k_p, key = jax.random.split(key, 3)
    x = jax.random.normal(k_x, (batch_size, seq_length, input_dim), dtype=jnp.float32)
    w_hx, w_hh, b_h, w_ph, b_p = _make_params(k_p, input_dim, num_hidden, num_classes)

    out = vanilla_rnn_forward(x, w_hx, w_hh, b_h, w_ph, b_p, max_t_block=4)
    out = jax.block_until_ready(out)
    ref = _ref_forward(x, w_hx, w_hh, b_h, w_ph, b_p)
    assert out.shape == (batch_size, num_classes)
    assert jnp.allclose(out, ref, atol=3e-4, rtol=2e-2), \
        f"check2 max abs diff {float(jnp.max(jnp.abs(out - ref)))}"

    print("KERNEL_OK")
</pallas_src>

<mosaic_0001>
module attributes {stable_mosaic.version = 11 : i64} {
  func.func @kernel(%arg0: i32, %arg1: i32, %arg2: memref<3x8x4xf32, #tpu.memory_space<vmem>>, %arg3: memref<4x128xbf16, #tpu.memory_space<vmem>>, %arg4: memref<1x128xf32, #tpu.memory_space<vmem>>, %arg5: memref<128x128xbf16, #tpu.memory_space<vmem>>, %arg6: memref<128x128xbf16, #tpu.memory_space<vmem>>, %arg7: memref<1x128xf32, #tpu.memory_space<vmem>>, %arg8: memref<8x128xf32, #tpu.memory_space<vmem>>, %arg9: memref<8x128xf32, #tpu.memory_space<vmem>>) attributes {dimension_semantics = [#tpu.dimension_semantics<parallel>, #tpu.dimension_semantics<arbitrary>], iteration_bounds = array<i64: 1, 3>, scalar_prefetch = 0 : i64, scratch_operands = 1 : i64, tpu.core_type = #tpu.core_type<tc>, window_params = [{transform_indices = @transform_0, window_bounds = array<i64: 3, 8, 4>}, {pipeline_mode = #tpu.pipeline_mode<synchronous>, transform_indices = @transform_1, window_bounds = array<i64: 4, 128>}, {pipeline_mode = #tpu.pipeline_mode<synchronous>, transform_indices = @transform_2, window_bounds = array<i64: 1, 128>}, {pipeline_mode = #tpu.pipeline_mode<synchronous>, transform_indices = @transform_3, window_bounds = array<i64: 128, 128>}, {pipeline_mode = #tpu.pipeline_mode<synchronous>, transform_indices = @transform_4, window_bounds = array<i64: 128, 128>}, {pipeline_mode = #tpu.pipeline_mode<synchronous>, transform_indices = @transform_5, window_bounds = array<i64: 1, 128>}, {transform_indices = @transform_6, window_bounds = array<i64: 8, 128>}]} {
    %c0_i32 = arith.constant 0 : i32
    %0 = arith.cmpi eq, %arg1, %c0_i32 : i32
    %1 = arith.extui %0 : i1 to i32
    %c0_i32_0 = arith.constant 0 : i32
    %2 = arith.cmpi ne, %1, %c0_i32_0 : i32
    scf.if %2 {
      %cst_18 = arith.constant 0.000000e+00 : f32
      %36 = vector.broadcast %cst_18 : f32 to vector<8x128xf32>
      %c0_19 = arith.constant 0 : index
      %c0_20 = arith.constant 0 : index
      %37 = vector.load %arg9[%c0_19, %c0_20] : memref<8x128xf32, #tpu.memory_space<vmem>>, vector<8x128xf32>
      tpu.vector_store %arg9[%c0_19, %c0_20], %36 {strides = array<i32>} : memref<8x128xf32, #tpu.memory_space<vmem>>, vector<8x128xf32>,
    } else {
    }
    %c0 = arith.constant 0 : index
    %c0_1 = arith.constant 0 : index
    %c0_2 = arith.constant 0 : index
    %3 = vector.load %arg2[%c0, %c0_1, %c0_2] : memref<3x8x4xf32, #tpu.memory_space<vmem>>, vector<3x8x4xf32>
    %4 = vector.shape_cast %3 : vector<3x8x4xf32> to vector<24x4xf32>
    %5 = arith.truncf %4 : vector<24x4xf32> to vector<24x4xbf16>
    %c0_3 = arith.constant 0 : index
    %c0_4 = arith.constant 0 : index
    %6 = vector.load %arg3[%c0_3, %c0_4] : memref<4x128xbf16, #tpu.memory_space<vmem>>, vector<4x128xbf16>
    %cst = arith.constant dense<0.000000e+00> : vector<24x128xf32>
    %7 = tpu.matmul %5, %6, %cst {dimension_numbers = #tpu.dot_dimension_numbers<[1], [0], [0], [1], [0, 0, 1, 1], [], []>} : vector<24x4xbf16>, vector<4x128xbf16>, vector<24x128xf32> -> vector<24x128xf32>
    %c0_5 = arith.constant 0 : index
    %c0_6 = arith.constant 0 : index
    %8 = vector.load %arg4[%c0_5, %c0_6] : memref<1x128xf32, #tpu.memory_space<vmem>>, vector<1x128xf32>
    %9 = vector.broadcast %8 : vector<1x128xf32> to vector<24x128xf32>
    %10 = arith.addf %7, %9 : vector<24x128xf32>
    %c0_7 = arith.constant 0 : index
    %c0_8 = arith.constant 0 : index
    %11 = vector.load %arg5[%c0_7, %c0_8] : memref<128x128xbf16, #tpu.memory_space<vmem>>, vector<128x128xbf16>
    %c0_9 = arith.constant 0 : index
    %c0_10 = arith.constant 0 : index
    %12 = vector.load %arg9[%c0_9, %c0_10] : memref<8x128xf32, #tpu.memory_space<vmem>>, vector<8x128xf32>
    %c3_i32 = arith.constant 3 : i32
    %13 = arith.muli %arg1, %c3_i32 : i32
    %14 = vector.extract_strided_slice %10 {offsets = [0, 0], sizes = [8, 128], strides = [1, 1]} : vector<24x128xf32> to vector<8x128xf32>
    %15 = arith.truncf %12 : vector<8x128xf32> to vector<8x128xbf16>
    %cst_11 = arith.constant dense<0.000000e+00> : vector<8x128xf32>
    %16 = tpu.matmul %15, %11, %cst_11 {dimension_numbers = #tpu.dot_dimension_numbers<[1], [0], [0], [1], [0, 0, 1, 1], [], []>} : vector<8x128xbf16>, vector<128x128xbf16>, vector<8x128xf32> -> vector<8x128xf32>
    %17 = arith.addf %14, %16 : vector<8x128xf32>
    %18 = math.tanh %17 : vector<8x128xf32>
    %19 = vector.extract_strided_slice %10 {offsets = [8, 0], sizes = [8, 128], strides = [1, 1]} : vector<24x128xf32> to vector<8x128xf32>
    %20 = arith.truncf %18 : vector<8x128xf32> to vector<8x128xbf16>
    %cst_12 = arith.constant dense<0.000000e+00> : vector<8x128xf32>
    %21 = tpu.matmul %20, %11, %cst_12 {dimension_numbers = #tpu.dot_dimension_numbers<[1], [0], [0], [1], [0, 0, 1, 1], [], []>} : vector<8x128xbf16>, vector<128x128xbf16>, vector<8x128xf32> -> vector<8x128xf32>
    %22 = arith.addf %19, %21 : vector<8x128xf32>
    %23 = math.tanh %22 : vector<8x128xf32>
    %24 = vector.extract_strided_slice %10 {offsets = [16, 0], sizes = [8, 128], strides = [1, 1]} : vector<24x128xf32> to vector<8x128xf32>
    %25 = arith.truncf %23 : vector<8x128xf32> to vector<8x128xbf16>
    %cst_13 = arith.constant dense<0.000000e+00> : vector<8x128xf32>
    %26 = tpu.matmul %25, %11, %cst_13 {dimension_numbers = #tpu.dot_dimension_numbers<[1], [0], [0], [1], [0, 0, 1, 1], [], []>} : vector<8x128xbf16>, vector<128x128xbf16>, vector<8x128xf32> -> vector<8x128xf32>
    %27 = arith.addf %24, %26 : vector<8x128xf32>
    %28 = math.tanh %27 : vector<8x128xf32>
    %c2_i32 = arith.constant 2 : i32
    %29 = arith.addi %13, %c2_i32 : i32
    %c8_i32 = arith.constant 8 : i32
    %30 = arith.cmpi slt, %29, %c8_i32 : i32
    %31 = arith.select %30, %28, %23 : vector<8x128xf32>
    %c0_14 = arith.constant 0 : index
    %c0_15 = arith.constant 0 : index
    %32 = vector.load %arg9[%c0_14, %c0_15] : memref<8x128xf32, #tpu.memory_space<vmem>>, vector<8x128xf32>
    tpu.vector_store %arg9[%c0_14, %c0_15], %31 {strides = array<i32>} : memref<8x128xf32, #tpu.memory_space<vmem>>, vector<8x128xf32>,
    %c2_i32_16 = arith.constant 2 : i32
    %33 = arith.cmpi eq, %arg1, %c2_i32_16 : i32
    %34 = arith.extui %33 : i1 to i32
    %c0_i32_17 = arith.constant 0 : i32
    %35 = arith.cmpi ne, %34, %c0_i32_17 : i32
    scf.if %35 {
      %c0_18 = arith.constant 0 : index
      %c0_19 = arith.constant 0 : index
      %36 = vector.load %arg6[%c0_18, %c0_19] : memref<128x128xbf16, #tpu.memory_space<vmem>>, vector<128x128xbf16>
      %c0_20 = arith.constant 0 : index
      %c0_21 = arith.constant 0 : index
      %37 = vector.load %arg7[%c0_20, %c0_21] : memref<1x128xf32, #tpu.memory_space<vmem>>, vector<1x128xf32>
      %38 = arith.truncf %31 : vector<8x128xf32> to vector<8x128xbf16>
      %cst_22 = arith.constant dense<0.000000e+00> : vector<8x128xf32>
      %39 = tpu.matmul %38, %36, %cst_22 {dimension_numbers = #tpu.dot_dimension_numbers<[1], [0], [0], [1], [0, 0, 1, 1], [], []>} : vector<8x128xbf16>, vector<128x128xbf16>, vector<8x128xf32> -> vector<8x128xf32>
      %40 = vector.broadcast %37 : vector<1x128xf32> to vector<8x128xf32>
      %41 = arith.addf %39, %40 : vector<8x128xf32>
      %c0_23 = arith.constant 0 : index
      %c0_24 = arith.constant 0 : index
      %42 = vector.load %arg8[%c0_23, %c0_24] : memref<8x128xf32, #tpu.memory_space<vmem>>, vector<8x128xf32>
      tpu.vector_store %arg8[%c0_23, %c0_24], %41 {strides = array<i32>} : memref<8x128xf32, #tpu.memory_space<vmem>>, vector<8x128xf32>,
    } else {
    }
    return
  }
  func.func @transform_0(%arg0: i32, %arg1: i32) -> (i32, i32, i32) {
    %c0_i32 = arith.constant 0 : i32
    %c0_i32_0 = arith.constant 0 : i32
    return %arg1, %arg0, %c0_i32 : i32, i32, i32
  }
  func.func @transform_1(%arg0: i32, %arg1: i32) -> (i32, i32) {
    %c0_i32 = arith.constant 0 : i32
    %c0_i32_0 = arith.constant 0 : i32
    %c0_i32_1 = arith.constant 0 : i32
    return %c0_i32, %c0_i32_0 : i32, i32
  }
  func.func @transform_2(%arg0: i32, %arg1: i32) -> (i32, i32) {
    %c0_i32 = arith.constant 0 : i32
    %c0_i32_0 = arith.constant 0 : i32
    %c0_i32_1 = arith.constant 0 : i32
    return %c0_i32, %c0_i32_0 : i32, i32
  }
  func.func @transform_3(%arg0: i32, %arg1: i32) -> (i32, i32) {
    %c0_i32 = arith.constant 0 : i32
    %c0_i32_0 = arith.constant 0 : i32
    %c0_i32_1 = arith.constant 0 : i32
    return %c0_i32, %c0_i32_0 : i32, i32
  }
  func.func @transform_4(%arg0: i32, %arg1: i32) -> (i32, i32) {
    %c0_i32 = arith.constant 0 : i32
    %c0_i32_0 = arith.constant 0 : i32
    %c0_i32_1 = arith.constant 0 : i32
    return %c0_i32, %c0_i32_0 : i32, i32
  }
  func.func @transform_5(%arg0: i32, %arg1: i32) -> (i32, i32) {
    %c0_i32 = arith.constant 0 : i32
    %c0_i32_0 = arith.constant 0 : i32
    %c0_i32_1 = arith.constant 0 : i32
    return %c0_i32, %c0_i32_0 : i32, i32
  }
  func.func @transform_6(%arg0: i32, %arg1: i32) -> (i32, i32) {
    %c0_i32 = arith.constant 0 : i32
    %c0_i32_0 = arith.constant 0 : i32
    return %arg0, %c0_i32 : i32, i32
  }
}

</mosaic_0001>

<llo_original>
// kernel: tpu_custom_call.1
$region0: #{tpu_custom_call.1}
  #allocation0 [shape = 'u32[]', space=smem, size = 0x4, offset = 0x4, fixed_abs, tag = 'smem constant byte address 0x4 - core index']
  #allocation1 [shape = 'u32[144,128]{1,0:T(1,128)}', space=vmem, size = 0x12000, scoped, tag = 'internal scratch']
  #allocation2 [shape = 'f32[8,128]{1,0:T(8,128)}', space=vmem, size = 0x1000, scoped, tag = 'scratch operand']
  %s0 = inlined_call_operand.vmem [shape: f32[9,8,4], index: 0, kind: input, shape index: {}]
  %s1 = inlined_call_operand.vmem [shape: bf16[4,128], index: 1, kind: input, shape index: {}]
  %s2 = inlined_call_operand.vmem [shape: f32[1,128], index: 2, kind: input, shape index: {}]
  %s3 = inlined_call_operand.vmem [shape: bf16[128,128], index: 3, kind: input, shape index: {}]
  %s4 = inlined_call_operand.hbm [shape: bf16[128,128], index: 4, kind: input, shape index: {}]
  %s5 = inlined_call_operand.vmem [shape: f32[1,128], index: 5, kind: input, shape index: {}]
  %s6 = inlined_call_operand.hbm [shape: f32[8,128], index: 6, kind: output, shape index: {}]
  %s7 = sld [smem:[#allocation0]]
  $region69: #{tpu_custom_call.1} parent=0
    _
  %s9 = ssub.s32 1, %s7
  %s10 = scalar_select 0, %s9, %s7
  $region1: #{tpu_custom_call.1} parent=0
    #allocation3 [shape = 'u8[32768]{0}', space=vmem, size = 0x8000, scoped, tag = 'input window, operand 4, single buffered']
    #allocation4 [shape = 's32[2]{0}', space=sflag, size = 0x8, scoped, tag = 'scoped memory for tpu_custom_call.1']
    #allocation5 [shape = 's32[2]{0}', space=sflag, size = 0x8, scoped, tag = 'scoped memory for tpu_custom_call.1']
    #allocation6 [shape = 'u8[4096]{0}', space=vmem, size = 0x1000, scoped, tag = 'output window, operand 0, single buffered']
    %11 = vsyncpa [#allocation4], 0
    %12 = vsyncpa [#allocation5], 0
    loop: start=0, step=1, limit=5
    $region2: #{tpu_custom_call.1} parent=1 // loop_pre_header
      _
    $region3: #{tpu_custom_call.1} parent=1 // loop_header
      %s14 = sphi 0, %s18
      %p15 = scmp.ge.s32.totalorder %s14, 5
      %s21 = sphi 0, %s33
      %s22 = sphi 0, %s29
      %s23 = sphi 0, %s21
      %s24 = sphi 0, %s22
      %s25 = sphi 0, %s23
      %s26 = sphi 0, %s24
      %s38 = sphi 0, %s40
      %s41 = sphi 0, %s38
      %s42 = sphi 0, %s41
      %s58 = sphi 0, %s42
      %s62 = sphi 0, %s62
      %s64 = sphi 0, %s62
      %s65 = sphi 0, %s64
      %s79 = sphi 0, %s65
      %s83 = sphi 0, %s83
      %s85 = sphi 0, %s83
      %s86 = sphi 0, %s85
      %s100 = sphi 0, %s86
      %s104 = sphi 0, %s104
      %s106 = sphi 0, %s104
      %s107 = sphi 0, %s106
      %s121 = sphi 0, %s107
      %s125 = sphi 0, %s125
      %s127 = sphi 0, %s125
      %s128 = sphi 0, %s127
      %s142 = sphi 0, %s128
      %s146 = sphi 0, %s146
      %s148 = sphi 0, %s146
      %s149 = sphi 0, %s148
      %s163 = sphi 0, %s149
      %s169 = sphi 0, %s171
      %s172 = sphi 0, %s169
      %s173 = sphi 0, %s172
      %s189 = sphi 0, %s173
    $region4: #{tpu_custom_call.1} parent=1 // loop_header_branch
      %17 = sbr.rel (%p15) target = $region8
    $region5: #{tpu_custom_call.1} parent=1 // loop_body
      %s19 = ssub.s32 %s14, 1
      %s20 = ssub.s32 %s14, 2
      %s27 = sadd.s32 1, %s22
      %p28 = scmp.ge.s32.totalorder %s27, 3
      %s29 = scalar_select %p28, 0, %s27
      %s30 = sadd.s32 1, %s21
      %s31 = scalar_select %p28, %s30, %s21
      %p32 = scmp.ge.s32.totalorder %s31, 1
      %s33 = scalar_select %p32, 0, %s31
      %s34 = ssub.s32 %s22, %s29
      %s35 = ssub.s32 %s21, %s33
      %s36 = sor.u32 %s34, %s35
      %p37 = scmp.eq.s32.totalorder %s36, 0
      %s39 = sadd.s32 %s38, 1
      %s40 = scalar_select %p37, %s38, %s39
      %p43 = pneg %p37
      %p44 = scmp.eq.s32.totalorder %s14, 2
      %p45 = por %p43, %p44
      %p46 = scmp.ne.s32.totalorder %s38, %s41
      %p47 = scmp.eq.s32.totalorder %s14, 0
      %p48 = por %p46, %p47
      %p49 = scmp.ne.s32.totalorder %s38, %s41
      %p50 = scmp.eq.s32.totalorder %s19, 2
      %p51 = por %p49, %p50
      %p52 = scmp.ne.s32.totalorder %s41, %s42
      %p53 = scmp.eq.s32.totalorder %s19, 0
      %p54 = por %p52, %p53
      %p55 = scmp.ne.s32.totalorder %s41, %s42
      %p56 = scmp.eq.s32.totalorder %s20, 2
      %p57 = por %p55, %p56
      %p59 = scmp.ne.s32.totalorder %s42, %s58
      %p60 = scmp.eq.s32.totalorder %s20, 0
      %p61 = por %p59, %p60
      %s63 = sadd.s32 %s62, 1
      %p66 = scmp.eq.s32.totalorder %s14, 2
      %p67 = scmp.ne.s32.totalorder %s62, %s64
      %p68 = scmp.eq.s32.totalorder %s14, 0
      %p69 = por %p67, %p68
      %p70 = scmp.ne.s32.totalorder %s62, %s64
      %p71 = scmp.eq.s32.totalorder %s19, 2
      %p72 = por %p70, %p71
      %p73 = scmp.ne.s32.totalorder %s64, %s65
      %p74 = scmp.eq.s32.totalorder %s19, 0
      %p75 = por %p73, %p74
      %p76 = scmp.ne.s32.totalorder %s64, %s65
      %p77 = scmp.eq.s32.totalorder %s20, 2
      %p78 = por %p76, %p77
      %p80 = scmp.ne.s32.totalorder %s65, %s79
      %p81 = scmp.eq.s32.totalorder %s20, 0
      %p82 = por %p80, %p81
      %s84 = sadd.s32 %s83, 1
      %p87 = scmp.eq.s32.totalorder %s14, 2
      %p88 = scmp.ne.s32.totalorder %s83, %s85
      %p89 = scmp.eq.s32.totalorder %s14, 0
      %p90 = por %p88, %p89
      %p91 = scmp.ne.s32.totalorder %s83, %s85
      %p92 = scmp.eq.s32.totalorder %s19, 2
      %p93 = por %p91, %p92
      %p94 = scmp.ne.s32.totalorder %s85, %s86
      %p95 = scmp.eq.s32.totalorder %s19, 0
      %p96 = por %p94, %p95
      %p97 = scmp.ne.s32.totalorder %s85, %s86
      %p98 = scmp.eq.s32.totalorder %s20, 2
      %p99 = por %p97, %p98
      %p101 = scmp.ne.s32.totalorder %s86, %s100
      %p102 = scmp.eq.s32.totalorder %s20, 0
      %p103 = por %p101, %p102
      %s105 = sadd.s32 %s104, 1
      %p108 = scmp.eq.s32.totalorder %s14, 2
      %p109 = scmp.ne.s32.totalorder %s104, %s106
      %p110 = scmp.eq.s32.totalorder %s14, 0
      %p111 = por %p109, %p110
      %p112 = scmp.ne.s32.totalorder %s104, %s106
      %p113 = scmp.eq.s32.totalorder %s19, 2
      %p114 = por %p112, %p113
      %p115 = scmp.ne.s32.totalorder %s106, %s107
      %p116 = scmp.eq.s32.totalorder %s19, 0
      %p117 = por %p115, %p116
      %p118 = scmp.ne.s32.totalorder %s106, %s107
      %p119 = scmp.eq.s32.totalorder %s20, 2
      %p120 = por %p118, %p119
      %p122 = scmp.ne.s32.totalorder %s107, %s121
      %p123 = scmp.eq.s32.totalorder %s20, 0
      %p124 = por %p122, %p123
      %s126 = sadd.s32 %s125, 1
      %p129 = scmp.eq.s32.totalorder %s14, 2
      %p130 = scmp.ne.s32.totalorder %s125, %s127
      %p131 = scmp.eq.s32.totalorder %s14, 0
      %p132 = por %p130, %p131
      %p133 = scmp.ne.s32.totalorder %s125, %s127
      %p134 = scmp.eq.s32.totalorder %s19, 2
      %p135 = por %p133, %p134
      %p136 = scmp.ne.s32.totalorder %s127, %s128
      %p137 = scmp.eq.s32.totalorder %s19, 0
      %p138 = por %p136, %p137
      %p139 = scmp.ne.s32.totalorder %s127, %s128
      %p140 = scmp.eq.s32.totalorder %s20, 2
      %p141 = por %p139, %p140
      %p143 = scmp.ne.s32.totalorder %s128, %s142
      %p144 = scmp.eq.s32.totalorder %s20, 0
      %p145 = por %p143, %p144
      %s147 = sadd.s32 %s146, 1
      %p150 = scmp.eq.s32.totalorder %s14, 2
      %p151 = scmp.ne.s32.totalorder %s146, %s148
      %p152 = scmp.eq.s32.totalorder %s14, 0
      %p153 = por %p151, %p152
      %p154 = scmp.ne.s32.totalorder %s146, %s148
      %p155 = scmp.eq.s32.totalorder %s19, 2
      %p156 = por %p154, %p155
      %p157 = scmp.ne.s32.totalorder %s148, %s149
      %p158 = scmp.eq.s32.totalorder %s19, 0
      %p159 = por %p157, %p158
      %p160 = scmp.ne.s32.totalorder %s148, %s149
      %p161 = scmp.eq.s32.totalorder %s20, 2
      %p162 = por %p160, %p161
      %p164 = scmp.ne.s32.totalorder %s149, %s163
      %p165 = scmp.eq.s32.totalorder %s20, 0
      %p166 = por %p164, %p165
      %s167 = ssub.s32 %s21, %s33
      %p168 = scmp.eq.s32.totalorder %s167, 0
      %s170 = sadd.s32 %s169, 1
      %s171 = scalar_select %p168, %s169, %s170
      %p174 = pneg %p168
      %p175 = scmp.eq.s32.totalorder %s14, 2
      %p176 = por %p174, %p175
      %p177 = scmp.ne.s32.totalorder %s169, %s172
      %p178 = scmp.eq.s32.totalorder %s14, 0
      %p179 = por %p177, %p178
      %p180 = scmp.ne.s32.totalorder %s169, %s172
      %p181 = scmp.eq.s32.totalorder %s19, 2
      %p182 = por %p180, %p181
      %p183 = scmp.ne.s32.totalorder %s172, %s173
      %p184 = scmp.eq.s32.totalorder %s19, 0
      %p185 = por %p183, %p184
      %p186 = scmp.ne.s32.totalorder %s172, %s173
      %p187 = scmp.eq.s32.totalorder %s20, 2
      %p188 = por %p186, %p187
      %p190 = scmp.ne.s32.totalorder %s173, %s189
      %p191 = scmp.eq.s32.totalorder %s20, 0
      %p192 = por %p190, %p191
      %p193 = scmp.le.s32.totalorder 1, %s14
      %p194 = scmp.lt.s32.totalorder %s14, 4
      %p195 = pnand %p193, %p194
      %p196 = pneg %p195
      // Predicated region
      $region9: #{tpu_custom_call.1} parent=5 // pred_check
        _
      $region10: #{tpu_custom_call.1} parent=5 // pred_check_branch
        %198 = sbr.rel (%p195) target = $region12
      $region11: #{tpu_custom_call.1} parent=5 // pred_region
        %s199 = ssub.s32 %s14, 1
        // Predicated region
        $region13: #{tpu_custom_call.1} parent=11 // pred_check
          %p200 = pneg %p75
        $region14: #{tpu_custom_call.1} parent=11 // pred_check_branch
          %202 = sbr.rel (%p200) target = $region16
        $region15: #{tpu_custom_call.1} parent=11 // pred_region
          _
        $region16: #{tpu_custom_call.1} parent=11 // pred_fallthru
          _
        // Predicated region
        $region17: #{tpu_custom_call.1} parent=11 // pred_check
          %p203 = pneg %p96
        $region18: #{tpu_custom_call.1} parent=11 // pred_check_branch
          %205 = sbr.rel (%p203) target = $region20
        $region19: #{tpu_custom_call.1} parent=11 // pred_region
          _
        $region20: #{tpu_custom_call.1} parent=11 // pred_fallthru
          _
        // Predicated region
        $region21: #{tpu_custom_call.1} parent=11 // pred_check
          %p206 = pneg %p117
        $region22: #{tpu_custom_call.1} parent=11 // pred_check_branch
          %208 = sbr.rel (%p206) target = $region24
        $region23: #{tpu_custom_call.1} parent=11 // pred_region
          _
        $region24: #{tpu_custom_call.1} parent=11 // pred_fallthru
          _
        // Predicated region
        $region25: #{tpu_custom_call.1} parent=11 // pred_check
          %p209 = pneg %p138
        $region26: #{tpu_custom_call.1} parent=11 // pred_check_branch
          %211 = sbr.rel (%p209) target = $region28
        $region27: #{tpu_custom_call.1} parent=11 // pred_region
          %s213 = ssub.s32 1024, 1024
          %214 = vsyncadd [#allocation4], %s213
          %s215 = sshll.u32 [#allocation3], 4
          %s216 = int_to_ptr.vmem [resolvable:$true] %s215
          %221 = dma.hbm_to_vmem [thread:$0]  %s4, 1024, %s216, [#allocation4], 64, 64, 4
        $region28: #{tpu_custom_call.1} parent=11 // pred_fallthru
          _
        // Predicated region
        $region29: #{tpu_custom_call.1} parent=11 // pred_check
          %p222 = pneg %p159
        $region30: #{tpu_custom_call.1} parent=11 // pred_check_branch
          %224 = sbr.rel (%p222) target = $region32
        $region31: #{tpu_custom_call.1} parent=11 // pred_region
          _
        $region32: #{tpu_custom_call.1} parent=11 // pred_fallthru
          _
      $region12: #{tpu_custom_call.1} parent=5 // pred_fallthru
        _
      %p225 = scmp.lt.s32.totalorder %s14, 3
      // Predicated region
      $region33: #{tpu_custom_call.1} parent=5 // pred_check
        %p226 = pneg %p225
      $region34: #{tpu_custom_call.1} parent=5 // pred_check_branch
        %228 = sbr.rel (%p226) target = $region36
      $region35: #{tpu_custom_call.1} parent=5 // pred_region
        // Predicated region
        $region37: #{tpu_custom_call.1} parent=35 // pred_check
          %p229 = pneg %p48
        $region38: #{tpu_custom_call.1} parent=35 // pred_check_branch
          %231 = sbr.rel (%p229) target = $region40
        $region39: #{tpu_custom_call.1} parent=35 // pred_region
          %s232 = smul.u32 3, %s22
          %p233 = scmp.lt.s32.totalorder %s232, 8
          %s234 = scalar_select %p233, %s232, 8
          %p235 = scmp.lt.s32.totalorder %s21, 0
          %s236 = scalar_select %p235, %s21, 0
          %s237 = sadd.s32 %s236, %s234
          %s238 = smul.addr %s237, 8
          %s239 = scalar_lea.vmem %s0, %s238
          %s240 = smul.u32 3, %s22
        $region40: #{tpu_custom_call.1} parent=35 // pred_fallthru
          _
      $region36: #{tpu_custom_call.1} parent=5 // pred_fallthru
        _
      %p241 = scmp.le.s32.totalorder 1, %s14
      %p242 = scmp.lt.s32.totalorder %s14, 4
      %p243 = pnand %p241, %p242
      %p244 = pneg %p243
      // Predicated region
      $region41: #{tpu_custom_call.1} parent=5 // pred_check
        _
      $region42: #{tpu_custom_call.1} parent=5 // pred_check_branch
        %246 = sbr.rel (%p243) target = $region44
      $region43: #{tpu_custom_call.1} parent=5 // pred_region
        %s247 = ssub.s32 %s14, 1
        // Predicated region
        $region45: #{tpu_custom_call.1} parent=43 // pred_check
          %p248 = pneg %p138
        $region46: #{tpu_custom_call.1} parent=43 // pred_check_branch
          %250 = sbr.rel (%p248) target = $region48
        $region47: #{tpu_custom_call.1} parent=43 // pred_region
          %251 = dma.done [#allocation4], 1024
        $region48: #{tpu_custom_call.1} parent=43 // pred_fallthru
          _
        %s252 = smul.u32 3, %s24
        %p253 = scmp.lt.s32.totalorder %s252, 8
        %s254 = scalar_select %p253, %s252, 8
        %p255 = scmp.lt.s32.totalorder %s23, 0
        %s256 = scalar_select %p255, %s23, 0
        %s257 = sadd.s32 %s256, %s254
        %s258 = smul.addr %s257, 8
        %s259 = scalar_lea.vmem %s0, %s258
        %p260 = pneg %p54
        %p261 = pneg %p51
        %p262 = pneg %p75
        %p263 = pneg %p72
        %p264 = pneg %p96
        %p265 = pneg %p93
        %p266 = pneg %p117
        %p267 = pneg %p114
        %p268 = pneg %p138
        %p269 = pneg %p135
        %p270 = pneg %p159
        %p271 = pneg %p156
        %p272 = pneg %p185
        %p273 = pneg %p182
        %s274 = smul.u32 3, %s24
        %p275 = scmp.lt.s32.totalorder %s274, 8
        %s276 = scalar_select %p275, %s274, 8
        %p277 = scmp.lt.s32.totalorder %s23, 0
        %s278 = scalar_select %p277, %s23, 0
        %s279 = sadd.s32 %s278, %s276
        %s280 = smul.addr %s279, 8
        %s281 = scalar_lea.vmem %s0, %s280
        %s282 = smul.u32 3, %s24
        %p284 = scmp.eq.s32.totalorder %s24, 0
        // Predicated region
        $region49: #{tpu_custom_call.1} parent=43 // pred_check
          %p285 = pneg %p284
        $region50: #{tpu_custom_call.1} parent=43 // pred_check_branch
          %287 = sbr.rel (%p285) target = $region52
        $region51: #{tpu_custom_call.1} parent=43 // pred_region
          %288 = vst [vmem:[#allocation2] sm:$0xff] 0.0
        $region52: #{tpu_custom_call.1} parent=43 // pred_fallthru
          _
        %v289 = vld [vmem:[%s281] sm:$0xff]
        %v290 = vld [vmem:[%s281 + $0x8] sm:$0xff]
        %v291 = vld [vmem:[%s281 + $0x10] sm:$0xff]
        %v292 = vpack.c.bf16 %v290, %v289
        %v293 = vpack.c.bf16 %v291, %v291
        %v294 = vld [vmem:[%s1] sm:$0x3]
        %v295 = vld [vmem:[%s2] sm:$0x1]
        %v297 = vlaneseq
        %v298 = vshrl.u32 %v297, 7
        %v299 = vsub.s32 0, %v298
        %v300 = vrot.slane %v295, %v299
        %vm302 = vcmask 31744
        %v304 = vsel %vm302, %v292, 0
        %v307 = vsel %vm302, %v293, 0
        %vm309 = vcmask 1041408
        %v311 = vsel %vm309, %v294, 0
        %313 = vmatprep.subr.bf16.mxu0 0
        %314 = vmatpush1.bf16.msra.mxu0 0
        %315 = vmatprep.subr.bf16.mxu0 0
        %316 = vmatpush1.bf16.msra.mxu0 0
        %317 = vmatprep.subr.bf16.mxu0 0
        %318 = vmatpush1.bf16.msra.mxu0 0
        %319 = vmatprep.subr.bf16.mxu0 0
        %320 = vmatpush1.bf16.msra.mxu0 0
        %321 = vmatprep.subr.bf16.mxu0 0
        %322 = vmatpush1.bf16.msra.mxu0 0
        %323 = vmatprep.subr.bf16.mxu0 0
        %324 = vmatpush1.bf16.msra.mxu0 0
        %325 = vmatprep.subr.bf16.mxu0 0
        %326 = vmatpush1.bf16.msra.mxu0 0
        %327 = vmatprep.subr.bf16.mxu0 0
        %328 = vmatpush1.bf16.msra.mxu0 %v311
        %329 = vmatprep.subr.bf16.mxu0 0
        %330 = vmatpush2.bf16.msra.mxu0 0
        %331 = vmatprep.subr.bf16.mxu0 0
        %332 = vmatpush2.bf16.msra.mxu0 0
        %333 = vmatprep.subr.bf16.mxu0 0
        %334 = vmatpush2.bf16.msra.mxu0 0
        %335 = vmatprep.subr.bf16.mxu0 0
        %336 = vmatpush2.bf16.msra.mxu0 0
        %337 = vmatprep.subr.bf16.mxu0 0
        %338 = vmatpush2.bf16.msra.mxu0 0
        %339 = vmatprep.subr.bf16.mxu0 0
        %340 = vmatpush2.bf16.msra.mxu0 0
        %341 = vmatprep.subr.bf16.mxu0 0
        %342 = vmatpush2.bf16.msra.mxu0 0
        %343 = vmatprep.subr.bf16.mxu0 0
        %344 = vmatpush2.bf16.msra.mxu0 0
        %345 = vmatprep.mubr.bf16.mxu0 0
        %346 = vmatmul.mubr.bf16.gmra.mxu0 %v304
        %v347 = vpop.f32.mrf.mxu0
        %v348 = vadd.f32 %v300, %v347
        %v349 = vpop.f32.mrf.mxu0
        %v350 = vpop.f32.mrf.mxu0
        %v351 = vadd.f32 %v300, %v350
        %v352 = vpop.f32.mrf.mxu0
        %353 = vmatprep.mubr.bf16.mxu0 0
        %354 = vmatmul.mubr.bf16.gmra.mxu0 %v307
        %v355 = vpop.f32.mrf.mxu0
        %v356 = vadd.f32 %v300, %v355
        %v357 = vpop.f32.mrf.mxu0
        %v358 = vpop.f32.mrf.mxu0
        %v359 = vpop.f32.mrf.mxu0
        %360 = vdwg.mxu0
        %v361 = vld [vmem:[%s3] sm:$0xf]
        %v362 = vld [vmem:[%s3 + $0x4] sm:$0xf]
        %v363 = vld [vmem:[%s3 + $0x8] sm:$0xf]
        %v364 = vld [vmem:[%s3 + $0xc] sm:$0xf]
        %v365 = vld [vmem:[%s3 + $0x10] sm:$0xf]
        %v366 = vld [vmem:[%s3 + $0x14] sm:$0xf]
        %v367 = vld [vmem:[%s3 + $0x18] sm:$0xf]
        %v368 = vld [vmem:[%s3 + $0x1c] sm:$0xf]
        %v369 = vld [vmem:[%s3 + $0x20] sm:$0xf]
        %v370 = vld [vmem:[%s3 + $0x24] sm:$0xf]
        %v371 = vld [vmem:[%s3 + $0x28] sm:$0xf]
        %v372 = vld [vmem:[%s3 + $0x2c] sm:$0xf]
        %v373 = vld [vmem:[%s3 + $0x30] sm:$0xf]
        %v374 = vld [vmem:[%s3 + $0x34] sm:$0xf]
        %v375 = vld [vmem:[%s3 + $0x38] sm:$0xf]
        %v376 = vld [vmem:[%s3 + $0x3c] sm:$0xf]
        %v377 = vld [vmem:[#allocation2] sm:$0xff]
        %s378 = smul.u32 %s24, 3
        %v379 = vpack.c.bf16 %v377, %v377
        %v396 = vunpack.c.l.b16 %v361
        %v397 = vunpack.c.l.b16 %v362
        %v398 = vunpack.c.l.b16 %v363
        %v399 = vunpack.c.l.b16 %v364
        %v400 = vunpack.c.l.b16 %v365
        %v401 = vunpack.c.l.b16 %v366
        %v402 = vunpack.c.l.b16 %v367
        %v403 = vunpack.c.l.b16 %v368
        %v404 = vunpack.c.l.b16 %v369
        %v405 = vunpack.c.l.b16 %v370
        %v406 = vunpack.c.l.b16 %v371
        %v407 = vunpack.c.l.b16 %v372
        %v408 = vunpack.c.l.b16 %v373
        %v409 = vunpack.c.l.b16 %v374
        %v410 = vunpack.c.l.b16 %v375
        %v411 = vunpack.c.l.b16 %v376
        %v412 = vpack.c.b16 %v397, %v396
        %v413 = vpack.c.b16 %v399, %v398
        %v414 = vpack.c.b16 %v401, %v400
        %v415 = vpack.c.b16 %v403, %v402
        %v416 = vpack.c.b16 %v405, %v404
        %v417 = vpack.c.b16 %v407, %v406
        %v418 = vpack.c.b16 %v409, %v408
        %v419 = vpack.c.b16 %v411, %v410
        %428 = vmatprep.subr.bf16.mxu0 0
        %429 = vmatpush1.bf16.msra.mxu0 %v419
        %430 = vmatprep.subr.bf16.mxu0 0
        %431 = vmatpush1.bf16.msra.mxu0 %v418
        %432 = vmatprep.subr.bf16.mxu0 0
        %433 = vmatpush1.bf16.msra.mxu0 %v417
        %434 = vmatprep.subr.bf16.mxu0 0
        %435 = vmatpush1.bf16.msra.mxu0 %v416
        %436 = vmatprep.subr.bf16.mxu0 0
        %437 = vmatpush1.bf16.msra.mxu0 %v415
        %438 = vmatprep.subr.bf16.mxu0 0
        %439 = vmatpush1.bf16.msra.mxu0 %v414
        %440 = vmatprep.subr.bf16.mxu0 0
        %441 = vmatpush1.bf16.msra.mxu0 %v413
        %442 = vmatprep.subr.bf16.mxu0 0
        %443 = vmatpush1.bf16.msra.mxu0 %v412
        %444 = vmatprep.subr.bf16.mxu0 0
        %445 = vmatpush2.bf16.msra.mxu0 0
        %446 = vmatprep.subr.bf16.mxu0 0
        %447 = vmatpush2.bf16.msra.mxu0 0
        %448 = vmatprep.subr.bf16.mxu0 0
        %449 = vmatpush2.bf16.msra.mxu0 0
        %450 = vmatprep.subr.bf16.mxu0 0
        %451 = vmatpush2.bf16.msra.mxu0 0
        %452 = vmatprep.subr.bf16.mxu0 0
        %453 = vmatpush2.bf16.msra.mxu0 0
        %454 = vmatprep.subr.bf16.mxu0 0
        %455 = vmatpush2.bf16.msra.mxu0 0
        %456 = vmatprep.subr.bf16.mxu0 0
        %457 = vmatpush2.bf16.msra.mxu0 0
        %458 = vmatprep.subr.bf16.mxu0 0
        %459 = vmatpush2.bf16.msra.mxu0 0
        %460 = vmatprep.mubr.bf16.mxu0 0
        %461 = vmatmul.mubr.bf16.gmra.mxu0 %v379
        %v462 = vpop.f32.mrf.mxu0
        %v463 = vadd.f32 0.0, %v462
        %v464 = vpop.f32.mrf.mxu0
        %v465 = vpop.f32.mrf.mxu0
        %v466 = vpop.f32.mrf.mxu0
        %467 = vdwg.mxu0
        %v468 = vadd.f32 %v348, %v463
        %v469 = vtanh.pop %v468
        %v470 = vpack.c.bf16 %v469, %v469
        %471 = vmatprep.subr.bf16.mxu0 0
        %472 = vmatpush1.bf16.msra.mxu0 %v419
        %473 = vmatprep.subr.bf16.mxu0 0
        %474 = vmatpush1.bf16.msra.mxu0 %v418
        %475 = vmatprep.subr.bf16.mxu0 0
        %476 = vmatpush1.bf16.msra.mxu0 %v417
        %477 = vmatprep.subr.bf16.mxu0 0
        %478 = vmatpush1.bf16.msra.mxu0 %v416
        %479 = vmatprep.subr.bf16.mxu0 0
        %480 = vmatpush1.bf16.msra.mxu0 %v415
        %481 = vmatprep.subr.bf16.mxu0 0
        %482 = vmatpush1.bf16.msra.mxu0 %v414
        %483 = vmatprep.subr.bf16.mxu0 0
        %484 = vmatpush1.bf16.msra.mxu0 %v413
        %485 = vmatprep.subr.bf16.mxu0 0
        %486 = vmatpush1.bf16.msra.mxu0 %v412
        %487 = vmatprep.subr.bf16.mxu0 0
        %488 = vmatpush2.bf16.msra.mxu0 0
        %489 = vmatprep.subr.bf16.mxu0 0
        %490 = vmatpush2.bf16.msra.mxu0 0
        %491 = vmatprep.subr.bf16.mxu0 0
        %492 = vmatpush2.bf16.msra.mxu0 0
        %493 = vmatprep.subr.bf16.mxu0 0
        %494 = vmatpush2.bf16.msra.mxu0 0
        %495 = vmatprep.subr.bf16.mxu0 0
        %496 = vmatpush2.bf16.msra.mxu0 0
        %497 = vmatprep.subr.bf16.mxu0 0
        %498 = vmatpush2.bf16.msra.mxu0 0
        %499 = vmatprep.subr.bf16.mxu0 0
        %500 = vmatpush2.bf16.msra.mxu0 0
        %501 = vmatprep.subr.bf16.mxu0 0
        %502 = vmatpush2.bf16.msra.mxu0 0
        %503 = vmatprep.mubr.bf16.mxu0 0
        %504 = vmatmul.mubr.bf16.gmra.mxu0 %v470
        %v505 = vpop.f32.mrf.mxu0
        %v506 = vadd.f32 0.0, %v505
        %v507 = vpop.f32.mrf.mxu0
        %v508 = vpop.f32.mrf.mxu0
        %v509 = vpop.f32.mrf.mxu0
        %510 = vdwg.mxu0
        %v511 = vadd.f32 %v351, %v506
        %v512 = vtanh.pop %v511
        %v513 = vpack.c.bf16 %v512, %v512
        %514 = vmatprep.subr.bf16.mxu0 0
        %515 = vmatpush1.bf16.msra.mxu0 %v419
        %516 = vmatprep.subr.bf16.mxu0 0
        %517 = vmatpush1.bf16.msra.mxu0 %v418
        %518 = vmatprep.subr.bf16.mxu0 0
        %519 = vmatpush1.bf16.msra.mxu0 %v417
        %520 = vmatprep.subr.bf16.mxu0 0
        %521 = vmatpush1.bf16.msra.mxu0 %v416
        %522 = vmatprep.subr.bf16.mxu0 0
        %523 = vmatpush1.bf16.msra.mxu0 %v415
        %524 = vmatprep.subr.bf16.mxu0 0
        %525 = vmatpush1.bf16.msra.mxu0 %v414
        %526 = vmatprep.subr.bf16.mxu0 0
        %527 = vmatpush1.bf16.msra.mxu0 %v413
        %528 = vmatprep.subr.bf16.mxu0 0
        %529 = vmatpush1.bf16.msra.mxu0 %v412
        %530 = vmatprep.subr.bf16.mxu0 0
        %531 = vmatpush2.bf16.msra.mxu0 0
        %532 = vmatprep.subr.bf16.mxu0 0
        %533 = vmatpush2.bf16.msra.mxu0 0
        %534 = vmatprep.subr.bf16.mxu0 0
        %535 = vmatpush2.bf16.msra.mxu0 0
        %536 = vmatprep.subr.bf16.mxu0 0
        %537 = vmatpush2.bf16.msra.mxu0 0
        %538 = vmatprep.subr.bf16.mxu0 0
        %539 = vmatpush2.bf16.msra.mxu0 0
        %540 = vmatprep.subr.bf16.mxu0 0
        %541 = vmatpush2.bf16.msra.mxu0 0
        %542 = vmatprep.subr.bf16.mxu0 0
        %543 = vmatpush2.bf16.msra.mxu0 0
        %544 = vmatprep.subr.bf16.mxu0 0
        %545 = vmatpush2.bf16.msra.mxu0 0
        %546 = vmatprep.mubr.bf16.mxu0 0
        %547 = vmatmul.mubr.bf16.gmra.mxu0 %v513
        %v548 = vpop.f32.mrf.mxu0
        %v549 = vadd.f32 0.0, %v548
        %v550 = vpop.f32.mrf.mxu0
        %v551 = vpop.f32.mrf.mxu0
        %v552 = vpop.f32.mrf.mxu0
        %553 = vdwg.mxu0
        %v554 = vadd.f32 %v356, %v549
        %v555 = vtanh.pop %v554
        %s556 = sadd.s32 %s378, 2
        %p557 = scmp.lt.s32.totalorder %s556, 8
        %s558 = scalar_select %p557, 1, 0
        %v559 = vstv %s558
        %vm560 = vcmp.eq.s32.totalorder %v559, 1
        %v561 = vsel %vm560, %v555, %v512
        %562 = vst [vmem:[#allocation2] sm:$0xff] %v561
        %p563 = scmp.eq.s32.totalorder %s24, 2
        // Predicated region
        $region53: #{tpu_custom_call.1} parent=43 // pred_check
          %p564 = pneg %p563
        $region54: #{tpu_custom_call.1} parent=43 // pred_check_branch
          %566 = sbr.rel (%p564) target = $region56
        $region55: #{tpu_custom_call.1} parent=43 // pred_region
          %v567 = vld [vmem:[#allocation3] sm:$0xf]
          %v568 = vld [vmem:[#allocation3 + $0x4] sm:$0xf]
          %v569 = vld [vmem:[#allocation3 + $0x8] sm:$0xf]
          %v570 = vld [vmem:[#allocation3 + $0xc] sm:$0xf]
          %v571 = vld [vmem:[#allocation3 + $0x10] sm:$0xf]
          %v572 = vld [vmem:[#allocation3 + $0x14] sm:$0xf]
          %v573 = vld [vmem:[#allocation3 + $0x18] sm:$0xf]
          %v574 = vld [vmem:[#allocation3 + $0x1c] sm:$0xf]
          %v575 = vld [vmem:[#allocation3 + $0x20] sm:$0xf]
          %v576 = vld [vmem:[#allocation3 + $0x24] sm:$0xf]
          %v577 = vld [vmem:[#allocation3 + $0x28] sm:$0xf]
          %v578 = vld [vmem:[#allocation3 + $0x2c] sm:$0xf]
          %v579 = vld [vmem:[#allocation3 + $0x30] sm:$0xf]
          %v580 = vld [vmem:[#allocation3 + $0x34] sm:$0xf]
          %v581 = vld [vmem:[#allocation3 + $0x38] sm:$0xf]
          %v582 = vld [vmem:[#allocation3 + $0x3c] sm:$0xf]
          %v583 = vld [vmem:[%s5] sm:$0x1]
          %v584 = vpack.c.bf16 %v561, %v561
          %v586 = vlaneseq
          %v587 = vshrl.u32 %v586, 7
          %v588 = vsub.s32 0, %v587
          %v589 = vrot.slane %v583, %v588
          %v607 = vunpack.c.l.b16 %v567
          %v608 = vunpack.c.l.b16 %v568
          %v609 = vunpack.c.l.b16 %v569
          %v610 = vunpack.c.l.b16 %v570
          %v611 = vunpack.c.l.b16 %v571
          %v612 = vunpack.c.l.b16 %v572
          %v613 = vunpack.c.l.b16 %v573
          %v614 = vunpack.c.l.b16 %v574
          %v615 = vunpack.c.l.b16 %v575
          %v616 = vunpack.c.l.b16 %v576
          %v617 = vunpack.c.l.b16 %v577
          %v618 = vunpack.c.l.b16 %v578
          %v619 = vunpack.c.l.b16 %v579
          %v620 = vunpack.c.l.b16 %v580
          %v621 = vunpack.c.l.b16 %v581
          %v622 = vunpack.c.l.b16 %v582
          %v623 = vpack.c.b16 %v608, %v607
          %v624 = vpack.c.b16 %v610, %v609
          %v625 = vpack.c.b16 %v612, %v611
          %v626 = vpack.c.b16 %v614, %v613
          %v627 = vpack.c.b16 %v616, %v615
          %v628 = vpack.c.b16 %v618, %v617
          %v629 = vpack.c.b16 %v620, %v619
          %v630 = vpack.c.b16 %v622, %v621
          %639 = vmatprep.subr.bf16.mxu0 0
          %640 = vmatpush1.bf16.msra.mxu0 %v630
          %641 = vmatprep.subr.bf16.mxu0 0
          %642 = vmatpush1.bf16.msra.mxu0 %v629
          %643 = vmatprep.subr.bf16.mxu0 0
          %644 = vmatpush1.bf16.msra.mxu0 %v628
          %645 = vmatprep.subr.bf16.mxu0 0
          %646 = vmatpush1.bf16.msra.mxu0 %v627
          %647 = vmatprep.subr.bf16.mxu0 0
          %648 = vmatpush1.bf16.msra.mxu0 %v626
          %649 = vmatprep.subr.bf16.mxu0 0
          %650 = vmatpush1.bf16.msra.mxu0 %v625
          %651 = vmatprep.subr.bf16.mxu0 0
          %652 = vmatpush1.bf16.msra.mxu0 %v624
          %653 = vmatprep.subr.bf16.mxu0 0
          %654 = vmatpush1.bf16.msra.mxu0 %v623
          %655 = vmatprep.subr.bf16.mxu0 0
          %656 = vmatpush2.bf16.msra.mxu0 0
          %657 = vmatprep.subr.bf16.mxu0 0
          %658 = vmatpush2.bf16.msra.mxu0 0
          %659 = vmatprep.subr.bf16.mxu0 0
          %660 = vmatpush2.bf16.msra.mxu0 0
          %661 = vmatprep.subr.bf16.mxu0 0
          %662 = vmatpush2.bf16.msra.mxu0 0
          %663 = vmatprep.subr.bf16.mxu0 0
          %664 = vmatpush2.bf16.msra.mxu0 0
          %665 = vmatprep.subr.bf16.mxu0 0
          %666 = vmatpush2.bf16.msra.mxu0 0
          %667 = vmatprep.subr.bf16.mxu0 0
          %668 = vmatpush2.bf16.msra.mxu0 0
          %669 = vmatprep.subr.bf16.mxu0 0
          %670 = vmatpush2.bf16.msra.mxu0 0
          %671 = vmatprep.mubr.bf16.mxu0 0
          %672 = vmatmul.mubr.bf16.gmra.mxu0 %v584
          %v673 = vpop.f32.mrf.mxu0
          %v674 = vadd.f32 %v589, %v673
          %v675 = vpop.f32.mrf.mxu0
          %v676 = vpop.f32.mrf.mxu0
          %v677 = vpop.f32.mrf.mxu0
          %678 = vdwg.mxu0
          %679 = vst [vmem:[#allocation6] sm:$0xff] %v674
        $region56: #{tpu_custom_call.1} parent=43 // pred_fallthru
          _
        // Predicated region
        $region57: #{tpu_custom_call.1} parent=43 // pred_check
          %p680 = pneg %p182
        $region58: #{tpu_custom_call.1} parent=43 // pred_check_branch
          %682 = sbr.rel (%p680) target = $region60
        $region59: #{tpu_custom_call.1} parent=43 // pred_region
          %s684 = ssub.s32 128, 128
          %685 = vsyncadd [#allocation5], %s684
          %s686 = smul.addr %s23, 128
          %s687 = scalar_lea.hbm %s6, %s686
          %s689 = sshll.u32 [#allocation6], 4
          %s690 = int_to_ptr.vmem [resolvable:$true] %s689
          %692 = dma.vmem_to_hbm [thread:$0]  %s690, 128, %s687, [#allocation5]
        $region60: #{tpu_custom_call.1} parent=43 // pred_fallthru
          _
        // Predicated region
        $region61: #{tpu_custom_call.1} parent=43 // pred_check
          %p693 = pneg %p182
        $region62: #{tpu_custom_call.1} parent=43 // pred_check_branch
          %695 = sbr.rel (%p693) target = $region64
        $region63: #{tpu_custom_call.1} parent=43 // pred_region
          %696 = dma.done [#allocation5], 128
        $region64: #{tpu_custom_call.1} parent=43 // pred_fallthru
          _
      $region44: #{tpu_custom_call.1} parent=5 // pred_fallthru
        _
      %p697 = scmp.le.s32.totalorder 2, %s14
      // Predicated region
      $region65: #{tpu_custom_call.1} parent=5 // pred_check
        %p698 = pneg %p697
      $region66: #{tpu_custom_call.1} parent=5 // pred_check_branch
        %700 = sbr.rel (%p698) target = $region68
      $region67: #{tpu_custom_call.1} parent=5 // pred_region
        %s701 = ssub.s32 %s14, 2
      $region68: #{tpu_custom_call.1} parent=5 // pred_fallthru
        _
    $region6: #{tpu_custom_call.1} parent=1 // loop_footer
      %s18 = sadd.s32 1, %s14
    $region7: #{tpu_custom_call.1} parent=1 // loop_footer_branch
      %13 = sbr.rel target = $region3
    $region8: #{tpu_custom_call.1} parent=1 // loop_exit
      _
    %702 = vsyncpa [#allocation4], 1
    %s703 = scalar_lea.sflag [#allocation4], 1
    %704 = vsyncpa %s703, 1
    %705 = vsyncpa [#allocation5], 1
    %s706 = scalar_lea.sflag [#allocation5], 1
    %707 = vsyncpa %s706, 1

</llo_original>
